<compile_context>
chip_gen: v7x
topology: tpu7x:2x2x1
jax: 0.10.0
libtpu: 0.0.40
codegen_flags: <defaults>
</compile_context>

<pallas_src>
import functools

import jax
import jax.numpy as jnp
import numpy as np
from jax import lax
from jax.experimental import pallas as pl
from jax.experimental.pallas import tpu as pltpu


def dct_matrix(n: int) -> np.ndarray:
    """Orthonormal DCT-II matrix (float64): (M @ v) == scipy dct(v, norm='ortho')."""
    i = np.arange(n, dtype=np.float64)
    m = np.cos(np.pi * (2.0 * i[None, :] + 1.0) * i[:, None] / (2.0 * n))
    m[0, :] *= np.sqrt(1.0 / n)
    m[1:, :] *= np.sqrt(2.0 / n)
    return m


def _round_up(x: int, m: int) -> int:
    return ((x + m - 1) // m) * m


def _dct_layer_kernel(x_ref, kt_ref, scale_ref, bias_ref, o_ref):
    # x_ref : (TB, HWp)   flattened images (one block of many images)
    # kt_ref: (HWp, HWp)  padded kron(D_H, D_W)^T, grid-invariant
    # scale_ref/bias_ref: (1,) scalars in SMEM
    # Precision pinned: for f32 operands this forces the multi-pass f32
    # emulation (DEFAULT may lower to a single bf16 pass and log() amplifies
    # that rounding near zero coefficients); for bf16 operands it is a no-op.
    y = jnp.dot(
        x_ref[...],
        kt_ref[...],
        preferred_element_type=jnp.float32,
        precision=lax.Precision.HIGHEST,
    )
    y = jnp.log(jnp.abs(y) + 1e-13)
    o_ref[...] = (y * scale_ref[0] + bias_ref[0]).astype(o_ref.dtype)


@functools.partial(
    jax.jit, static_argnames=("tile_rows", "operand_dtype", "out_dtype")
)
def dct_layer(
    x,
    mean,
    std,
    *,
    tile_rows=None,
    operand_dtype=jnp.float32,   # set jnp.bfloat16 on v5e/v7x if tolerable
    out_dtype=jnp.float32,       # set jnp.bfloat16 on v6e to halve writeback
):
    """Pallas implementation of DCTLayer.forward. x: (B, C, H, W)."""
    B, C, H, W = x.shape
    n = B * C
    hw = H * W
    hwp = _round_up(hw, 128)            # lane-dense feature dim
    op_bytes = jnp.dtype(operand_dtype).itemsize

    # --- VMEM guard for the Kronecker trick (v7x has only 64 MiB VMEM) ---
    kron_bytes = hwp * hwp * op_bytes
    if kron_bytes > 8 * 1024 * 1024:
        # TODO(synk): for large H, W fall back to the separable two-matmul
        # form (D_H @ X @ D_W^T) with a K-tiled 'arbitrary' grid axis; the
        # kron form also scales as (HW)^2 FLOPs vs 2HW(H+W).
        raise NotImplementedError(
            f"kron DCT matrix is {kron_bytes / 2**20:.1f} MiB; too large for "
            "VMEM — use the separable DCT form for large images."
        )

    # Padded Kronecker DCT matrix (transposed for a right-multiply).
    k = np.kron(dct_matrix(H), dct_matrix(W))             # (hw, hw) float64
    kt_np = np.zeros((hwp, hwp), dtype=np.float32)
    kt_np[:hw, :hw] = k.T.astype(np.float32)
    kt = jnp.asarray(kt_np).astype(operand_dtype)

    # Flatten images; only pad the feature dim if hw is not lane-aligned
    # (a no-op for H=W=16).  No batch padding: ragged last block is clipped
    # by Pallas (rows are independent, no cross-row reductions).
    xf = x.reshape(n, hw).astype(operand_dtype)
    if hwp != hw:
        xf = jnp.pad(xf, ((0, 0), (0, hwp - hw)))

    # Tile rows: large tiles amortize the ~0.35 us/step pipeline overhead;
    # keep >= 2 grid steps when the batch allows it (v7x: 2 TCs share the
    # 'parallel' axis); sublane multiple of 8 (f32) / 16 (bf16).
    row_mult = 16 if op_bytes == 2 else 8
    if tile_rows is not None:
        tb = _round_up(tile_rows, row_mult)
    else:
        tb = min(1024, _round_up(max(n // 2, 1), row_mult))
    tb = max(row_mult, min(tb, _round_up(n, row_mult)))
    grid = (pl.cdiv(n, tb),)

    # Fused normalization constants:  out = y * scale + bias.
    scale = jnp.reshape(1.0 / std, (1,)).astype(jnp.float32)
    bias = jnp.reshape(-mean / std, (1,)).astype(jnp.float32)

    out = pl.pallas_call(
        _dct_layer_kernel,
        out_shape=jax.ShapeDtypeStruct((n, hwp), out_dtype),
        grid_spec=pltpu.PrefetchScalarGridSpec(
            num_scalar_prefetch=0,
            grid=grid,
            in_specs=[
                pl.BlockSpec((tb, hwp), lambda i: (i, 0)),
                # K^T is grid-invariant (index_map always (0,0)); Pallas keeps
                # it resident.  (Single-buffering it via pl.Buffered(1) would
                # only save hwp^2 bytes — negligible at hwp=256.)
                pl.BlockSpec((hwp, hwp), lambda i: (0, 0)),
                pl.BlockSpec(memory_space=pltpu.MemorySpace.SMEM),
                pl.BlockSpec(memory_space=pltpu.MemorySpace.SMEM),
            ],
            out_specs=pl.BlockSpec((tb, hwp), lambda i: (i, 0)),
        ),
        compiler_params=pltpu.CompilerParams(
            dimension_semantics=("parallel",),
        ),
        cost_estimate=pl.CostEstimate(
            flops=2 * n * hwp * hwp,
            transcendentals=n * hwp,
            bytes_accessed=(
                op_bytes * n * hwp                      # X
                + op_bytes * hwp * hwp                  # K^T
                + jnp.dtype(out_dtype).itemsize * n * hwp  # out
            ),
        ),
    )(xf, kt, scale, bias)

    if hwp != hw:
        out = out[:, :hw]
    return out.reshape(B, C, H, W)


if __name__ == "__main__":
    key = jax.random.PRNGKey(0)
    B, C, H, W = 2, 4, 16, 16
    x = jax.random.normal(key, (B, C, H, W), dtype=jnp.float32)

    # Scalar normalization parameters (module __init__ args).
    mean = jnp.float32(-2.5)
    std = jnp.float32(3.0)

    out = jax.block_until_ready(dct_layer(x, mean, std))
    assert out.shape == (B, C, H, W)
    assert out.dtype == jnp.float32

    # ---- float64 host reference (exact DCT2 + log + normalize) ----
    x64 = np.asarray(x, dtype=np.float64)
    dh = dct_matrix(H)
    dw = dct_matrix(W)
    # dct along axis -1 then axis -2  ==  D_H @ X @ D_W^T
    coeff = np.einsum("hk,bckw,vw->bchv", dh, x64, dw)
    ref_abs = np.abs(coeff) + 1e-13
    ref_log = (np.log(ref_abs) - float(mean)) / float(std)

    out64 = np.asarray(out, dtype=np.float64)
    out_abs = np.exp(out64 * float(std) + float(mean))   # recover |DCT| + 1e-13

    # Tight check in the coefficient domain (no log amplification of rounding).
    np.testing.assert_allclose(out_abs, ref_abs, rtol=1e-3, atol=1e-4)
    # Log-domain check away from near-zero DCT coefficients, where log()
    # turns benign f32 matmul rounding into large relative error.
    mask = ref_abs > 1e-2
    np.testing.assert_allclose(out64[mask], ref_log[mask], rtol=1e-3, atol=1e-3)

    print("KERNEL_OK")
</pallas_src>

<mosaic_0001>
module attributes {stable_mosaic.version = 11 : i64} {
  func.func @_dct_layer_kernel(%arg0: i32, %arg1: memref<8x256xf32, #tpu.memory_space<vmem>>, %arg2: memref<256x256xf32, #tpu.memory_space<vmem>>, %arg3: memref<1xf32, #tpu.memory_space<smem>>, %arg4: memref<1xf32, #tpu.memory_space<smem>>, %arg5: memref<8x256xf32, #tpu.memory_space<vmem>>) attributes {dimension_semantics = [#tpu.dimension_semantics<parallel>], iteration_bounds = array<i64: 1>, scalar_prefetch = 0 : i64, scratch_operands = 0 : i64, tpu.core_type = #tpu.core_type<tc>, window_params = [{transform_indices = @transform_0, window_bounds = array<i64: 8, 256>}, {pipeline_mode = #tpu.pipeline_mode<synchronous>, transform_indices = @transform_1, window_bounds = array<i64: 256, 256>}, {transform_indices = @transform_2, window_bounds = array<i64: 1>}, {transform_indices = @transform_3, window_bounds = array<i64: 1>}, {transform_indices = @transform_4, window_bounds = array<i64: 8, 256>}]} {
    %c0 = arith.constant 0 : index
    %c0_0 = arith.constant 0 : index
    %0 = vector.load %arg1[%c0, %c0_0] : memref<8x256xf32, #tpu.memory_space<vmem>>, vector<8x256xf32>
    %c0_1 = arith.constant 0 : index
    %c0_2 = arith.constant 0 : index
    %1 = vector.load %arg2[%c0_1, %c0_2] : memref<256x256xf32, #tpu.memory_space<vmem>>, vector<256x256xf32>
    %cst = arith.constant dense<0.000000e+00> : vector<8x256xf32>
    %2 = tpu.matmul %0, %1, %cst {dimension_numbers = #tpu.dot_dimension_numbers<[1], [0], [0], [1], [0, 0, 1, 1], [], []>, precision = #tpu.contract_precision<fp32>} : vector<8x256xf32>, vector<256x256xf32>, vector<8x256xf32> -> vector<8x256xf32>
    %3 = math.absf %2 : vector<8x256xf32>
    %cst_3 = arith.constant 9.99999982E-14 : f32
    %4 = vector.broadcast %cst_3 : f32 to vector<8x256xf32>
    %5 = arith.addf %3, %4 : vector<8x256xf32>
    %6 = math.log %5 : vector<8x256xf32>
    %c0_4 = arith.constant 0 : index
    %7 = memref.load %arg3[%c0_4] : memref<1xf32, #tpu.memory_space<smem>>
    %8 = vector.broadcast %7 : f32 to vector<8x256xf32>
    %9 = arith.mulf %6, %8 : vector<8x256xf32>
    %c0_5 = arith.constant 0 : index
    %10 = memref.load %arg4[%c0_5] : memref<1xf32, #tpu.memory_space<smem>>
    %11 = vector.broadcast %10 : f32 to vector<8x256xf32>
    %12 = arith.addf %9, %11 : vector<8x256xf32>
    %c0_6 = arith.constant 0 : index
    %c0_7 = arith.constant 0 : index
    %13 = vector.load %arg5[%c0_6, %c0_7] : memref<8x256xf32, #tpu.memory_space<vmem>>, vector<8x256xf32>
    tpu.vector_store %arg5[%c0_6, %c0_7], %12 {strides = array<i32>} : memref<8x256xf32, #tpu.memory_space<vmem>>, vector<8x256xf32>,
    return
  }
  func.func @transform_0(%arg0: i32) -> (i32, i32) {
    %c0_i32 = arith.constant 0 : i32
    %c0_i32_0 = arith.constant 0 : i32
    return %arg0, %c0_i32 : i32, i32
  }
  func.func @transform_1(%arg0: i32) -> (i32, i32) {
    %c0_i32 = arith.constant 0 : i32
    %c0_i32_0 = arith.constant 0 : i32
    %c0_i32_1 = arith.constant 0 : i32
    return %c0_i32, %c0_i32_0 : i32, i32
  }
  func.func @transform_2(%arg0: i32) -> i32 {
    %c0_i32 = arith.constant 0 : i32
    %c0_i32_0 = arith.constant 0 : i32
    return %c0_i32 : i32
  }
  func.func @transform_3(%arg0: i32) -> i32 {
    %c0_i32 = arith.constant 0 : i32
    %c0_i32_0 = arith.constant 0 : i32
    return %c0_i32 : i32
  }
  func.func @transform_4(%arg0: i32) -> (i32, i32) {
    %c0_i32 = arith.constant 0 : i32
    %c0_i32_0 = arith.constant 0 : i32
    return %arg0, %c0_i32 : i32, i32
  }
}

</mosaic_0001>

<llo_original>
// kernel: dct_layer.1
$region0: #{dct_layer.1}
  #allocation0 [shape = 'u32[]', space=smem, size = 0x4, offset = 0x4, fixed_abs, tag = 'smem constant byte address 0x4 - core index']
  #allocation1 [shape = 'u32[144,128]{1,0:T(1,128)}', space=vmem, size = 0x12000, scoped, tag = 'internal scratch']
  #allocation2 [shape = 'f32[1]{0:T(128)S(6)}', space=smem, size = 0x200, scoped, tag = 'scoped memory for dct_layer.1']
  #allocation3 [shape = 'f32[1]{0:T(128)S(6)}', space=smem, size = 0x200, scoped, tag = 'scoped memory for dct_layer.1']
  %s0 = inlined_call_operand.vmem [shape: f32[8,256], index: 0, kind: input, shape index: {}]
  %s1 = inlined_call_operand.hbm [shape: f32[256,256], index: 1, kind: input, shape index: {}]
  %s2 = inlined_call_operand.<no memory space> [shape: f32[1], index: 2, kind: input, shape index: {}]
  %s3 = inlined_call_operand.<no memory space> [shape: f32[1], index: 3, kind: input, shape index: {}]
  %s4 = inlined_call_operand.vmem [shape: f32[8,256], index: 4, kind: output, shape index: {}]
  %s5 = sld [smem:[#allocation0]]
  $region30: #{dct_layer.1} parent=0
    _
  %s7 = ssub.s32 1, %s5
  %s8 = scalar_select 0, %s7, %s5
  %9 = sst [smem:[#allocation2]] %s2
  %10 = sst [smem:[#allocation3]] %s3
  $region1: #{dct_layer.1} parent=0
    #allocation4 [shape = 'u8[262144]{0}', space=vmem, size = 0x40000, scoped, tag = 'input window, operand 1, single buffered']
    #allocation5 [shape = 's32[1]{0}', space=sflag, size = 0x4, scoped, tag = 'scoped memory for dct_layer.1']
    %11 = vsyncpa [#allocation5], 0
    // Predicated region
    $region2: #{dct_layer.1} parent=1 // pred_check
      _
    $region3: #{dct_layer.1} parent=1 // pred_check_branch
      %13 = sbr.rel (0) target = $region5
    $region4: #{dct_layer.1} parent=1 // pred_region
      _
    $region5: #{dct_layer.1} parent=1 // pred_fallthru
      _
    // Predicated region
    $region6: #{dct_layer.1} parent=1 // pred_check
      _
    $region7: #{dct_layer.1} parent=1 // pred_check_branch
      %15 = sbr.rel (0) target = $region9
    $region8: #{dct_layer.1} parent=1 // pred_region
      %s17 = ssub.s32 8192, 8192
      %18 = vsyncadd [#allocation5], %s17
      %s19 = sshll.u32 [#allocation4], 4
      %s20 = int_to_ptr.vmem [resolvable:$true] %s19
      %25 = dma.hbm_to_vmem [thread:$0]  %s1, 8192, %s20, [#allocation5], 256, 256, 16
    $region9: #{dct_layer.1} parent=1 // pred_fallthru
      _
    // Predicated region
    $region10: #{dct_layer.1} parent=1 // pred_check
      _
    $region11: #{dct_layer.1} parent=1 // pred_check_branch
      %27 = sbr.rel (0) target = $region13
    $region12: #{dct_layer.1} parent=1 // pred_region
      _
    $region13: #{dct_layer.1} parent=1 // pred_fallthru
      _
    // Predicated region
    $region14: #{dct_layer.1} parent=1 // pred_check
      _
    $region15: #{dct_layer.1} parent=1 // pred_check_branch
      %29 = sbr.rel (0) target = $region17
    $region16: #{dct_layer.1} parent=1 // pred_region
      _
    $region17: #{dct_layer.1} parent=1 // pred_fallthru
      _
    // Predicated region
    $region18: #{dct_layer.1} parent=1 // pred_check
      _
    $region19: #{dct_layer.1} parent=1 // pred_check_branch
      %31 = sbr.rel (0) target = $region21
    $region20: #{dct_layer.1} parent=1 // pred_region
      %32 = dma.done [#allocation5], 8192
    $region21: #{dct_layer.1} parent=1 // pred_fallthru
      _
    %v33 = vld [vmem:[%s0] sm:$0xff]
    %v34 = vld [vmem:[%s0 + $0x8] sm:$0xff]
    %v35 = vld [vmem:[#allocation4] sm:$0xff]
    %v36 = vld [vmem:[#allocation4 + $0x8] sm:$0xff]
    %v37 = vld [vmem:[#allocation4 + $0x10] sm:$0xff]
    %v38 = vld [vmem:[#allocation4 + $0x18] sm:$0xff]
    %v39 = vld [vmem:[#allocation4 + $0x20] sm:$0xff]
    %v40 = vld [vmem:[#allocation4 + $0x28] sm:$0xff]
    %v41 = vld [vmem:[#allocation4 + $0x30] sm:$0xff]
    %v42 = vld [vmem:[#allocation4 + $0x38] sm:$0xff]
    %v43 = vld [vmem:[#allocation4 + $0x40] sm:$0xff]
    %v44 = vld [vmem:[#allocation4 + $0x48] sm:$0xff]
    %v45 = vld [vmem:[#allocation4 + $0x50] sm:$0xff]
    %v46 = vld [vmem:[#allocation4 + $0x58] sm:$0xff]
    %v47 = vld [vmem:[#allocation4 + $0x60] sm:$0xff]
    %v48 = vld [vmem:[#allocation4 + $0x68] sm:$0xff]
    %v49 = vld [vmem:[#allocation4 + $0x70] sm:$0xff]
    %v50 = vld [vmem:[#allocation4 + $0x78] sm:$0xff]
    %v51 = vld [vmem:[#allocation4 + $0x80] sm:$0xff]
    %v52 = vld [vmem:[#allocation4 + $0x88] sm:$0xff]
    %v53 = vld [vmem:[#allocation4 + $0x90] sm:$0xff]
    %v54 = vld [vmem:[#allocation4 + $0x98] sm:$0xff]
    %v55 = vld [vmem:[#allocation4 + $0xa0] sm:$0xff]
    %v56 = vld [vmem:[#allocation4 + $0xa8] sm:$0xff]
    %v57 = vld [vmem:[#allocation4 + $0xb0] sm:$0xff]
    %v58 = vld [vmem:[#allocation4 + $0xb8] sm:$0xff]
    %v59 = vld [vmem:[#allocation4 + $0xc0] sm:$0xff]
    %v60 = vld [vmem:[#allocation4 + $0xc8] sm:$0xff]
    %v61 = vld [vmem:[#allocation4 + $0xd0] sm:$0xff]
    %v62 = vld [vmem:[#allocation4 + $0xd8] sm:$0xff]
    %v63 = vld [vmem:[#allocation4 + $0xe0] sm:$0xff]
    %v64 = vld [vmem:[#allocation4 + $0xe8] sm:$0xff]
    %v65 = vld [vmem:[#allocation4 + $0xf0] sm:$0xff]
    %v66 = vld [vmem:[#allocation4 + $0xf8] sm:$0xff]
    %v67 = vld [vmem:[#allocation4 + $0x100] sm:$0xff]
    %v68 = vld [vmem:[#allocation4 + $0x108] sm:$0xff]
    %v69 = vld [vmem:[#allocation4 + $0x110] sm:$0xff]
    %v70 = vld [vmem:[#allocation4 + $0x118] sm:$0xff]
    %v71 = vld [vmem:[#allocation4 + $0x120] sm:$0xff]
    %v72 = vld [vmem:[#allocation4 + $0x128] sm:$0xff]
    %v73 = vld [vmem:[#allocation4 + $0x130] sm:$0xff]
    %v74 = vld [vmem:[#allocation4 + $0x138] sm:$0xff]
    %v75 = vld [vmem:[#allocation4 + $0x140] sm:$0xff]
    %v76 = vld [vmem:[#allocation4 + $0x148] sm:$0xff]
    %v77 = vld [vmem:[#allocation4 + $0x150] sm:$0xff]
    %v78 = vld [vmem:[#allocation4 + $0x158] sm:$0xff]
    %v79 = vld [vmem:[#allocation4 + $0x160] sm:$0xff]
    %v80 = vld [vmem:[#allocation4 + $0x168] sm:$0xff]
    %v81 = vld [vmem:[#allocation4 + $0x170] sm:$0xff]
    %v82 = vld [vmem:[#allocation4 + $0x178] sm:$0xff]
    %v83 = vld [vmem:[#allocation4 + $0x180] sm:$0xff]
    %v84 = vld [vmem:[#allocation4 + $0x188] sm:$0xff]
    %v85 = vld [vmem:[#allocation4 + $0x190] sm:$0xff]
    %v86 = vld [vmem:[#allocation4 + $0x198] sm:$0xff]
    %v87 = vld [vmem:[#allocation4 + $0x1a0] sm:$0xff]
    %v88 = vld [vmem:[#allocation4 + $0x1a8] sm:$0xff]
    %v89 = vld [vmem:[#allocation4 + $0x1b0] sm:$0xff]
    %v90 = vld [vmem:[#allocation4 + $0x1b8] sm:$0xff]
    %v91 = vld [vmem:[#allocation4 + $0x1c0] sm:$0xff]
    %v92 = vld [vmem:[#allocation4 + $0x1c8] sm:$0xff]
    %v93 = vld [vmem:[#allocation4 + $0x1d0] sm:$0xff]
    %v94 = vld [vmem:[#allocation4 + $0x1d8] sm:$0xff]
    %v95 = vld [vmem:[#allocation4 + $0x1e0] sm:$0xff]
    %v96 = vld [vmem:[#allocation4 + $0x1e8] sm:$0xff]
    %v97 = vld [vmem:[#allocation4 + $0x1f0] sm:$0xff]
    %v98 = vld [vmem:[#allocation4 + $0x1f8] sm:$0xff]
    %v99 = vand.u32 %v36, 4294901760
    %100 = vmatprep.subr.mxu0 %v99
    %v101 = vand.u32 %v35, 4294901760
    %102 = vmatpush1.msra.mxu0 %v101
    %v103 = vand.u32 %v38, 4294901760
    %104 = vmatprep.subr.mxu0 %v103
    %v105 = vand.u32 %v37, 4294901760
    %106 = vmatpush1.msra.mxu0 %v105
    %v107 = vand.u32 %v40, 4294901760
    %108 = vmatprep.subr.mxu0 %v107
    %v109 = vand.u32 %v39, 4294901760
    %110 = vmatpush1.msra.mxu0 %v109
    %v111 = vand.u32 %v42, 4294901760
    %112 = vmatprep.subr.mxu0 %v111
    %v113 = vand.u32 %v41, 4294901760
    %114 = vmatpush1.msra.mxu0 %v113
    %v115 = vand.u32 %v44, 4294901760
    %116 = vmatprep.subr.mxu0 %v115
    %v117 = vand.u32 %v43, 4294901760
    %118 = vmatpush1.msra.mxu0 %v117
    %v119 = vand.u32 %v46, 4294901760
    %120 = vmatprep.subr.mxu0 %v119
    %v121 = vand.u32 %v45, 4294901760
    %122 = vmatpush1.msra.mxu0 %v121
    %v123 = vand.u32 %v48, 4294901760
    %124 = vmatprep.subr.mxu0 %v123
    %v125 = vand.u32 %v47, 4294901760
    %126 = vmatpush1.msra.mxu0 %v125
    %v127 = vand.u32 %v50, 4294901760
    %128 = vmatprep.subr.mxu0 %v127
    %v129 = vand.u32 %v49, 4294901760
    %130 = vmatpush1.msra.mxu0 %v129
    %v131 = vand.u32 %v52, 4294901760
    %132 = vmatprep.subr.mxu0 %v131
    %v133 = vand.u32 %v51, 4294901760
    %134 = vmatpush1.msra.mxu0 %v133
    %v135 = vand.u32 %v54, 4294901760
    %136 = vmatprep.subr.mxu0 %v135
    %v137 = vand.u32 %v53, 4294901760
    %138 = vmatpush1.msra.mxu0 %v137
    %v139 = vand.u32 %v56, 4294901760
    %140 = vmatprep.subr.mxu0 %v139
    %v141 = vand.u32 %v55, 4294901760
    %142 = vmatpush1.msra.mxu0 %v141
    %v143 = vand.u32 %v58, 4294901760
    %144 = vmatprep.subr.mxu0 %v143
    %v145 = vand.u32 %v57, 4294901760
    %146 = vmatpush1.msra.mxu0 %v145
    %v147 = vand.u32 %v60, 4294901760
    %148 = vmatprep.subr.mxu0 %v147
    %v149 = vand.u32 %v59, 4294901760
    %150 = vmatpush1.msra.mxu0 %v149
    %v151 = vand.u32 %v62, 4294901760
    %152 = vmatprep.subr.mxu0 %v151
    %v153 = vand.u32 %v61, 4294901760
    %154 = vmatpush1.msra.mxu0 %v153
    %v155 = vand.u32 %v64, 4294901760
    %156 = vmatprep.subr.mxu0 %v155
    %v157 = vand.u32 %v63, 4294901760
    %158 = vmatpush1.msra.mxu0 %v157
    %v159 = vand.u32 %v66, 4294901760
    %160 = vmatprep.subr.mxu0 %v159
    %v161 = vand.u32 %v65, 4294901760
    %162 = vmatpush1.msra.mxu0 %v161
    %v163 = vand.u32 %v68, 4294901760
    %164 = vmatprep.subr.mxu0 %v163
    %v165 = vand.u32 %v67, 4294901760
    %166 = vmatpush1.msra.mxu0 %v165
    %v167 = vand.u32 %v70, 4294901760
    %168 = vmatprep.subr.mxu0 %v167
    %v169 = vand.u32 %v69, 4294901760
    %170 = vmatpush1.msra.mxu0 %v169
    %v171 = vand.u32 %v72, 4294901760
    %172 = vmatprep.subr.mxu0 %v171
    %v173 = vand.u32 %v71, 4294901760
    %174 = vmatpush1.msra.mxu0 %v173
    %v175 = vand.u32 %v74, 4294901760
    %176 = vmatprep.subr.mxu0 %v175
    %v177 = vand.u32 %v73, 4294901760
    %178 = vmatpush1.msra.mxu0 %v177
    %v179 = vand.u32 %v76, 4294901760
    %180 = vmatprep.subr.mxu0 %v179
    %v181 = vand.u32 %v75, 4294901760
    %182 = vmatpush1.msra.mxu0 %v181
    %v183 = vand.u32 %v78, 4294901760
    %184 = vmatprep.subr.mxu0 %v183
    %v185 = vand.u32 %v77, 4294901760
    %186 = vmatpush1.msra.mxu0 %v185
    %v187 = vand.u32 %v80, 4294901760
    %188 = vmatprep.subr.mxu0 %v187
    %v189 = vand.u32 %v79, 4294901760
    %190 = vmatpush1.msra.mxu0 %v189
    %v191 = vand.u32 %v82, 4294901760
    %192 = vmatprep.subr.mxu0 %v191
    %v193 = vand.u32 %v81, 4294901760
    %194 = vmatpush1.msra.mxu0 %v193
    %v195 = vand.u32 %v84, 4294901760
    %196 = vmatprep.subr.mxu0 %v195
    %v197 = vand.u32 %v83, 4294901760
    %198 = vmatpush1.msra.mxu0 %v197
    %v199 = vand.u32 %v86, 4294901760
    %200 = vmatprep.subr.mxu0 %v199
    %v201 = vand.u32 %v85, 4294901760
    %202 = vmatpush1.msra.mxu0 %v201
    %v203 = vand.u32 %v88, 4294901760
    %204 = vmatprep.subr.mxu0 %v203
    %v205 = vand.u32 %v87, 4294901760
    %206 = vmatpush1.msra.mxu0 %v205
    %v207 = vand.u32 %v90, 4294901760
    %208 = vmatprep.subr.mxu0 %v207
    %v209 = vand.u32 %v89, 4294901760
    %210 = vmatpush1.msra.mxu0 %v209
    %v211 = vand.u32 %v92, 4294901760
    %212 = vmatprep.subr.mxu0 %v211
    %v213 = vand.u32 %v91, 4294901760
    %214 = vmatpush1.msra.mxu0 %v213
    %v215 = vand.u32 %v94, 4294901760
    %216 = vmatprep.subr.mxu0 %v215
    %v217 = vand.u32 %v93, 4294901760
    %218 = vmatpush1.msra.mxu0 %v217
    %v219 = vand.u32 %v96, 4294901760
    %220 = vmatprep.subr.mxu0 %v219
    %v221 = vand.u32 %v95, 4294901760
    %222 = vmatpush1.msra.mxu0 %v221
    %v223 = vand.u32 %v98, 4294901760
    %224 = vmatprep.subr.mxu0 %v223
    %v225 = vand.u32 %v97, 4294901760
    %226 = vmatpush1.msra.mxu0 %v225
    %v227 = vand.u32 %v34, 4294901760
    %v228 = vsub.f32 %v34, %v227
    %v229 = vand.u32 %v228, 4294901760
    %v230 = vsub.f32 %v228, %v229
    %v231 = vand.u32 %v230, 4294901760
    %232 = vmatprep.mubr.f32.mxu0 %v231
    %v233 = vand.u32 %v33, 4294901760
    %v234 = vsub.f32 %v33, %v233
    %v235 = vand.u32 %v234, 4294901760
    %v236 = vsub.f32 %v234, %v235
    %v237 = vand.u32 %v236, 4294901760
    %238 = vmatmul.mubr.f32.gmra.mrb[0].mxu0 %v237
    %v239 = vpop.f32.mrb[0].mxu0
    %v240 = vadd.f32 0.0, %v239
    %v241 = vpop.f32.mrb[0].mxu0
    %v242 = vadd.f32 0.0, %v241
    %243 = vdwg.mxu0
    %v244 = vand.u32 %v36, 4294901760
    %v245 = vsub.f32 %v36, %v244
    %v246 = vand.u32 %v245, 4294901760
    %v247 = vsub.f32 %v245, %v246
    %v248 = vand.u32 %v247, 4294901760
    %249 = vmatprep.subr.mxu0 %v248
    %v250 = vand.u32 %v35, 4294901760
    %v251 = vsub.f32 %v35, %v250
    %v252 = vand.u32 %v251, 4294901760
    %v253 = vsub.f32 %v251, %v252
    %v254 = vand.u32 %v253, 4294901760
    %255 = vmatpush1.msra.mxu0 %v254
    %v256 = vand.u32 %v38, 4294901760
    %v257 = vsub.f32 %v38, %v256
    %v258 = vand.u32 %v257, 4294901760
    %v259 = vsub.f32 %v257, %v258
    %v260 = vand.u32 %v259, 4294901760
    %261 = vmatprep.subr.mxu0 %v260
    %v262 = vand.u32 %v37, 4294901760
    %v263 = vsub.f32 %v37, %v262
    %v264 = vand.u32 %v263, 4294901760
    %v265 = vsub.f32 %v263, %v264
    %v266 = vand.u32 %v265, 4294901760
    %267 = vmatpush1.msra.mxu0 %v266
    %v268 = vand.u32 %v40, 4294901760
    %v269 = vsub.f32 %v40, %v268
    %v270 = vand.u32 %v269, 4294901760
    %v271 = vsub.f32 %v269, %v270
    %v272 = vand.u32 %v271, 4294901760
    %273 = vmatprep.subr.mxu0 %v272
    %v274 = vand.u32 %v39, 4294901760
    %v275 = vsub.f32 %v39, %v274
    %v276 = vand.u32 %v275, 4294901760
    %v277 = vsub.f32 %v275, %v276
    %v278 = vand.u32 %v277, 4294901760
    %279 = vmatpush1.msra.mxu0 %v278
    %v280 = vand.u32 %v42, 4294901760
    %v281 = vsub.f32 %v42, %v280
    %v282 = vand.u32 %v281, 4294901760
    %v283 = vsub.f32 %v281, %v282
    %v284 = vand.u32 %v283, 4294901760
    %285 = vmatprep.subr.mxu0 %v284
    %v286 = vand.u32 %v41, 4294901760
    %v287 = vsub.f32 %v41, %v286
    %v288 = vand.u32 %v287, 4294901760
    %v289 = vsub.f32 %v287, %v288
    %v290 = vand.u32 %v289, 4294901760
    %291 = vmatpush1.msra.mxu0 %v290
    %v292 = vand.u32 %v44, 4294901760
    %v293 = vsub.f32 %v44, %v292
    %v294 = vand.u32 %v293, 4294901760
    %v295 = vsub.f32 %v293, %v294
    %v296 = vand.u32 %v295, 4294901760
    %297 = vmatprep.subr.mxu0 %v296
    %v298 = vand.u32 %v43, 4294901760
    %v299 = vsub.f32 %v43, %v298
    %v300 = vand.u32 %v299, 4294901760
    %v301 = vsub.f32 %v299, %v300
    %v302 = vand.u32 %v301, 4294901760
    %303 = vmatpush1.msra.mxu0 %v302
    %v304 = vand.u32 %v46, 4294901760
    %v305 = vsub.f32 %v46, %v304
    %v306 = vand.u32 %v305, 4294901760
    %v307 = vsub.f32 %v305, %v306
    %v308 = vand.u32 %v307, 4294901760
    %309 = vmatprep.subr.mxu0 %v308
    %v310 = vand.u32 %v45, 4294901760
    %v311 = vsub.f32 %v45, %v310
    %v312 = vand.u32 %v311, 4294901760
    %v313 = vsub.f32 %v311, %v312
    %v314 = vand.u32 %v313, 4294901760
    %315 = vmatpush1.msra.mxu0 %v314
    %v316 = vand.u32 %v48, 4294901760
    %v317 = vsub.f32 %v48, %v316
    %v318 = vand.u32 %v317, 4294901760
    %v319 = vsub.f32 %v317, %v318
    %v320 = vand.u32 %v319, 4294901760
    %321 = vmatprep.subr.mxu0 %v320
    %v322 = vand.u32 %v47, 4294901760
    %v323 = vsub.f32 %v47, %v322
    %v324 = vand.u32 %v323, 4294901760
    %v325 = vsub.f32 %v323, %v324
    %v326 = vand.u32 %v325, 4294901760
    %327 = vmatpush1.msra.mxu0 %v326
    %v328 = vand.u32 %v50, 4294901760
    %v329 = vsub.f32 %v50, %v328
    %v330 = vand.u32 %v329, 4294901760
    %v331 = vsub.f32 %v329, %v330
    %v332 = vand.u32 %v331, 4294901760
    %333 = vmatprep.subr.mxu0 %v332
    %v334 = vand.u32 %v49, 4294901760
    %v335 = vsub.f32 %v49, %v334
    %v336 = vand.u32 %v335, 4294901760
    %v337 = vsub.f32 %v335, %v336
    %v338 = vand.u32 %v337, 4294901760
    %339 = vmatpush1.msra.mxu0 %v338
    %v340 = vand.u32 %v52, 4294901760
    %v341 = vsub.f32 %v52, %v340
    %v342 = vand.u32 %v341, 4294901760
    %v343 = vsub.f32 %v341, %v342
    %v344 = vand.u32 %v343, 4294901760
    %345 = vmatprep.subr.mxu0 %v344
    %v346 = vand.u32 %v51, 4294901760
    %v347 = vsub.f32 %v51, %v346
    %v348 = vand.u32 %v347, 4294901760
    %v349 = vsub.f32 %v347, %v348
    %v350 = vand.u32 %v349, 4294901760
    %351 = vmatpush1.msra.mxu0 %v350
    %v352 = vand.u32 %v54, 4294901760
    %v353 = vsub.f32 %v54, %v352
    %v354 = vand.u32 %v353, 4294901760
    %v355 = vsub.f32 %v353, %v354
    %v356 = vand.u32 %v355, 4294901760
    %357 = vmatprep.subr.mxu0 %v356
    %v358 = vand.u32 %v53, 4294901760
    %v359 = vsub.f32 %v53, %v358
    %v360 = vand.u32 %v359, 4294901760
    %v361 = vsub.f32 %v359, %v360
    %v362 = vand.u32 %v361, 4294901760
    %363 = vmatpush1.msra.mxu0 %v362
    %v364 = vand.u32 %v56, 4294901760
    %v365 = vsub.f32 %v56, %v364
    %v366 = vand.u32 %v365, 4294901760
    %v367 = vsub.f32 %v365, %v366
    %v368 = vand.u32 %v367, 4294901760
    %369 = vmatprep.subr.mxu0 %v368
    %v370 = vand.u32 %v55, 4294901760
    %v371 = vsub.f32 %v55, %v370
    %v372 = vand.u32 %v371, 4294901760
    %v373 = vsub.f32 %v371, %v372
    %v374 = vand.u32 %v373, 4294901760
    %375 = vmatpush1.msra.mxu0 %v374
    %v376 = vand.u32 %v58, 4294901760
    %v377 = vsub.f32 %v58, %v376
    %v378 = vand.u32 %v377, 4294901760
    %v379 = vsub.f32 %v377, %v378
    %v380 = vand.u32 %v379, 4294901760
    %381 = vmatprep.subr.mxu0 %v380
    %v382 = vand.u32 %v57, 4294901760
    %v383 = vsub.f32 %v57, %v382
    %v384 = vand.u32 %v383, 4294901760
    %v385 = vsub.f32 %v383, %v384
    %v386 = vand.u32 %v385, 4294901760
    %387 = vmatpush1.msra.mxu0 %v386
    %v388 = vand.u32 %v60, 4294901760
    %v389 = vsub.f32 %v60, %v388
    %v390 = vand.u32 %v389, 4294901760
    %v391 = vsub.f32 %v389, %v390
    %v392 = vand.u32 %v391, 4294901760
    %393 = vmatprep.subr.mxu0 %v392
    %v394 = vand.u32 %v59, 4294901760
    %v395 = vsub.f32 %v59, %v394
    %v396 = vand.u32 %v395, 4294901760
    %v397 = vsub.f32 %v395, %v396
    %v398 = vand.u32 %v397, 4294901760
    %399 = vmatpush1.msra.mxu0 %v398
    %v400 = vand.u32 %v62, 4294901760
    %v401 = vsub.f32 %v62, %v400
    %v402 = vand.u32 %v401, 4294901760
    %v403 = vsub.f32 %v401, %v402
    %v404 = vand.u32 %v403, 4294901760
    %405 = vmatprep.subr.mxu0 %v404
    %v406 = vand.u32 %v61, 4294901760
    %v407 = vsub.f32 %v61, %v406
    %v408 = vand.u32 %v407, 4294901760
    %v409 = vsub.f32 %v407, %v408
    %v410 = vand.u32 %v409, 4294901760
    %411 = vmatpush1.msra.mxu0 %v410
    %v412 = vand.u32 %v64, 4294901760
    %v413 = vsub.f32 %v64, %v412
    %v414 = vand.u32 %v413, 4294901760
    %v415 = vsub.f32 %v413, %v414
    %v416 = vand.u32 %v415, 4294901760
    %417 = vmatprep.subr.mxu0 %v416
    %v418 = vand.u32 %v63, 4294901760
    %v419 = vsub.f32 %v63, %v418
    %v420 = vand.u32 %v419, 4294901760
    %v421 = vsub.f32 %v419, %v420
    %v422 = vand.u32 %v421, 4294901760
    %423 = vmatpush1.msra.mxu0 %v422
    %v424 = vand.u32 %v66, 4294901760
    %v425 = vsub.f32 %v66, %v424
    %v426 = vand.u32 %v425, 4294901760
    %v427 = vsub.f32 %v425, %v426
    %v428 = vand.u32 %v427, 4294901760
    %429 = vmatprep.subr.mxu0 %v428
    %v430 = vand.u32 %v65, 4294901760
    %v431 = vsub.f32 %v65, %v430
    %v432 = vand.u32 %v431, 4294901760
    %v433 = vsub.f32 %v431, %v432
    %v434 = vand.u32 %v433, 4294901760
    %435 = vmatpush1.msra.mxu0 %v434
    %v436 = vand.u32 %v68, 4294901760
    %v437 = vsub.f32 %v68, %v436
    %v438 = vand.u32 %v437, 4294901760
    %v439 = vsub.f32 %v437, %v438
    %v440 = vand.u32 %v439, 4294901760
    %441 = vmatprep.subr.mxu0 %v440
    %v442 = vand.u32 %v67, 4294901760
    %v443 = vsub.f32 %v67, %v442
    %v444 = vand.u32 %v443, 4294901760
    %v445 = vsub.f32 %v443, %v444
    %v446 = vand.u32 %v445, 4294901760
    %447 = vmatpush1.msra.mxu0 %v446
    %v448 = vand.u32 %v70, 4294901760
    %v449 = vsub.f32 %v70, %v448
    %v450 = vand.u32 %v449, 4294901760
    %v451 = vsub.f32 %v449, %v450
    %v452 = vand.u32 %v451, 4294901760
    %453 = vmatprep.subr.mxu0 %v452
    %v454 = vand.u32 %v69, 4294901760
    %v455 = vsub.f32 %v69, %v454
    %v456 = vand.u32 %v455, 4294901760
    %v457 = vsub.f32 %v455, %v456
    %v458 = vand.u32 %v457, 4294901760
    %459 = vmatpush1.msra.mxu0 %v458
    %v460 = vand.u32 %v72, 4294901760
    %v461 = vsub.f32 %v72, %v460
    %v462 = vand.u32 %v461, 4294901760
    %v463 = vsub.f32 %v461, %v462
    %v464 = vand.u32 %v463, 4294901760
    %465 = vmatprep.subr.mxu0 %v464
    %v466 = vand.u32 %v71, 4294901760
    %v467 = vsub.f32 %v71, %v466
    %v468 = vand.u32 %v467, 4294901760
    %v469 = vsub.f32 %v467, %v468
    %v470 = vand.u32 %v469, 4294901760
    %471 = vmatpush1.msra.mxu0 %v470
    %v472 = vand.u32 %v74, 4294901760
    %v473 = vsub.f32 %v74, %v472
    %v474 = vand.u32 %v473, 4294901760
    %v475 = vsub.f32 %v473, %v474
    %v476 = vand.u32 %v475, 4294901760
    %477 = vmatprep.subr.mxu0 %v476
    %v478 = vand.u32 %v73, 4294901760
    %v479 = vsub.f32 %v73, %v478
    %v480 = vand.u32 %v479, 4294901760
    %v481 = vsub.f32 %v479, %v480
    %v482 = vand.u32 %v481, 4294901760
    %483 = vmatpush1.msra.mxu0 %v482
    %v484 = vand.u32 %v76, 4294901760
    %v485 = vsub.f32 %v76, %v484
    %v486 = vand.u32 %v485, 4294901760
    %v487 = vsub.f32 %v485, %v486
    %v488 = vand.u32 %v487, 4294901760
    %489 = vmatprep.subr.mxu0 %v488
    %v490 = vand.u32 %v75, 4294901760
    %v491 = vsub.f32 %v75, %v490
    %v492 = vand.u32 %v491, 4294901760
    %v493 = vsub.f32 %v491, %v492
    %v494 = vand.u32 %v493, 4294901760
    %495 = vmatpush1.msra.mxu0 %v494
    %v496 = vand.u32 %v78, 4294901760
    %v497 = vsub.f32 %v78, %v496
    %v498 = vand.u32 %v497, 4294901760
    %v499 = vsub.f32 %v497, %v498
    %v500 = vand.u32 %v499, 4294901760
    %501 = vmatprep.subr.mxu0 %v500
    %v502 = vand.u32 %v77, 4294901760
    %v503 = vsub.f32 %v77, %v502
    %v504 = vand.u32 %v503, 4294901760
    %v505 = vsub.f32 %v503, %v504
    %v506 = vand.u32 %v505, 4294901760
    %507 = vmatpush1.msra.mxu0 %v506
    %v508 = vand.u32 %v80, 4294901760
    %v509 = vsub.f32 %v80, %v508
    %v510 = vand.u32 %v509, 4294901760
    %v511 = vsub.f32 %v509, %v510
    %v512 = vand.u32 %v511, 4294901760
    %513 = vmatprep.subr.mxu0 %v512
    %v514 = vand.u32 %v79, 4294901760
    %v515 = vsub.f32 %v79, %v514
    %v516 = vand.u32 %v515, 4294901760
    %v517 = vsub.f32 %v515, %v516
    %v518 = vand.u32 %v517, 4294901760
    %519 = vmatpush1.msra.mxu0 %v518
    %v520 = vand.u32 %v82, 4294901760
    %v521 = vsub.f32 %v82, %v520
    %v522 = vand.u32 %v521, 4294901760
    %v523 = vsub.f32 %v521, %v522
    %v524 = vand.u32 %v523, 4294901760
    %525 = vmatprep.subr.mxu0 %v524
    %v526 = vand.u32 %v81, 4294901760
    %v527 = vsub.f32 %v81, %v526
    %v528 = vand.u32 %v527, 4294901760
    %v529 = vsub.f32 %v527, %v528
    %v530 = vand.u32 %v529, 4294901760
    %531 = vmatpush1.msra.mxu0 %v530
    %v532 = vand.u32 %v84, 4294901760
    %v533 = vsub.f32 %v84, %v532
    %v534 = vand.u32 %v533, 4294901760
    %v535 = vsub.f32 %v533, %v534
    %v536 = vand.u32 %v535, 4294901760
    %537 = vmatprep.subr.mxu0 %v536
    %v538 = vand.u32 %v83, 4294901760
    %v539 = vsub.f32 %v83, %v538
    %v540 = vand.u32 %v539, 4294901760
    %v541 = vsub.f32 %v539, %v540
    %v542 = vand.u32 %v541, 4294901760
    %543 = vmatpush1.msra.mxu0 %v542
    %v544 = vand.u32 %v86, 4294901760
    %v545 = vsub.f32 %v86, %v544
    %v546 = vand.u32 %v545, 4294901760
    %v547 = vsub.f32 %v545, %v546
    %v548 = vand.u32 %v547, 4294901760
    %549 = vmatprep.subr.mxu0 %v548
    %v550 = vand.u32 %v85, 4294901760
    %v551 = vsub.f32 %v85, %v550
    %v552 = vand.u32 %v551, 4294901760
    %v553 = vsub.f32 %v551, %v552
    %v554 = vand.u32 %v553, 4294901760
    %555 = vmatpush1.msra.mxu0 %v554
    %v556 = vand.u32 %v88, 4294901760
    %v557 = vsub.f32 %v88, %v556
    %v558 = vand.u32 %v557, 4294901760
    %v559 = vsub.f32 %v557, %v558
    %v560 = vand.u32 %v559, 4294901760
    %561 = vmatprep.subr.mxu0 %v560
    %v562 = vand.u32 %v87, 4294901760
    %v563 = vsub.f32 %v87, %v562
    %v564 = vand.u32 %v563, 4294901760
    %v565 = vsub.f32 %v563, %v564
    %v566 = vand.u32 %v565, 4294901760
    %567 = vmatpush1.msra.mxu0 %v566
    %v568 = vand.u32 %v90, 4294901760
    %v569 = vsub.f32 %v90, %v568
    %v570 = vand.u32 %v569, 4294901760
    %v571 = vsub.f32 %v569, %v570
    %v572 = vand.u32 %v571, 4294901760
    %573 = vmatprep.subr.mxu0 %v572
    %v574 = vand.u32 %v89, 4294901760
    %v575 = vsub.f32 %v89, %v574
    %v576 = vand.u32 %v575, 4294901760
    %v577 = vsub.f32 %v575, %v576
    %v578 = vand.u32 %v577, 4294901760
    %579 = vmatpush1.msra.mxu0 %v578
    %v580 = vand.u32 %v92, 4294901760
    %v581 = vsub.f32 %v92, %v580
    %v582 = vand.u32 %v581, 4294901760
    %v583 = vsub.f32 %v581, %v582
    %v584 = vand.u32 %v583, 4294901760
    %585 = vmatprep.subr.mxu0 %v584
    %v586 = vand.u32 %v91, 4294901760
    %v587 = vsub.f32 %v91, %v586
    %v588 = vand.u32 %v587, 4294901760
    %v589 = vsub.f32 %v587, %v588
    %v590 = vand.u32 %v589, 4294901760
    %591 = vmatpush1.msra.mxu0 %v590
    %v592 = vand.u32 %v94, 4294901760
    %v593 = vsub.f32 %v94, %v592
    %v594 = vand.u32 %v593, 4294901760
    %v595 = vsub.f32 %v593, %v594
    %v596 = vand.u32 %v595, 4294901760
    %597 = vmatprep.subr.mxu0 %v596
    %v598 = vand.u32 %v93, 4294901760
    %v599 = vsub.f32 %v93, %v598
    %v600 = vand.u32 %v599, 4294901760
    %v601 = vsub.f32 %v599, %v600
    %v602 = vand.u32 %v601, 4294901760
    %603 = vmatpush1.msra.mxu0 %v602
    %v604 = vand.u32 %v96, 4294901760
    %v605 = vsub.f32 %v96, %v604
    %v606 = vand.u32 %v605, 4294901760
    %v607 = vsub.f32 %v605, %v606
    %v608 = vand.u32 %v607, 4294901760
    %609 = vmatprep.subr.mxu0 %v608
    %v610 = vand.u32 %v95, 4294901760
    %v611 = vsub.f32 %v95, %v610
    %v612 = vand.u32 %v611, 4294901760
    %v613 = vsub.f32 %v611, %v612
    %v614 = vand.u32 %v613, 4294901760
    %615 = vmatpush1.msra.mxu0 %v614
    %v616 = vand.u32 %v98, 4294901760
    %v617 = vsub.f32 %v98, %v616
    %v618 = vand.u32 %v617, 4294901760
    %v619 = vsub.f32 %v617, %v618
    %v620 = vand.u32 %v619, 4294901760
    %621 = vmatprep.subr.mxu0 %v620
    %v622 = vand.u32 %v97, 4294901760
    %v623 = vsub.f32 %v97, %v622
    %v624 = vand.u32 %v623, 4294901760
    %v625 = vsub.f32 %v623, %v624
    %v626 = vand.u32 %v625, 4294901760
    %627 = vmatpush1.msra.mxu0 %v626
    %v628 = vand.u32 %v34, 4294901760
    %629 = vmatprep.mubr.f32.mxu0 %v628
    %v630 = vand.u32 %v33, 4294901760
    %631 = vmatmul.mubr.f32.gmra.mrb[0].mxu0 %v630
    %v632 = vpop.f32.mrb[0].mxu0
    %v633 = vadd.f32 %v240, %v632
    %v634 = vpop.f32.mrb[0].mxu0
    %v635 = vadd.f32 %v242, %v634
    %636 = vdwg.mxu0
    %v637 = vand.u32 %v36, 4294901760
    %v638 = vsub.f32 %v36, %v637
    %639 = vmatprep.subr.mxu0 %v638
    %v640 = vand.u32 %v35, 4294901760
    %v641 = vsub.f32 %v35, %v640
    %642 = vmatpush1.msra.mxu0 %v641
    %v643 = vand.u32 %v38, 4294901760
    %v644 = vsub.f32 %v38, %v643
    %645 = vmatprep.subr.mxu0 %v644
    %v646 = vand.u32 %v37, 4294901760
    %v647 = vsub.f32 %v37, %v646
    %648 = vmatpush1.msra.mxu0 %v647
    %v649 = vand.u32 %v40, 4294901760
    %v650 = vsub.f32 %v40, %v649
    %651 = vmatprep.subr.mxu0 %v650
    %v652 = vand.u32 %v39, 4294901760
    %v653 = vsub.f32 %v39, %v652
    %654 = vmatpush1.msra.mxu0 %v653
    %v655 = vand.u32 %v42, 4294901760
    %v656 = vsub.f32 %v42, %v655
    %657 = vmatprep.subr.mxu0 %v656
    %v658 = vand.u32 %v41, 4294901760
    %v659 = vsub.f32 %v41, %v658
    %660 = vmatpush1.msra.mxu0 %v659
    %v661 = vand.u32 %v44, 4294901760
    %v662 = vsub.f32 %v44, %v661
    %663 = vmatprep.subr.mxu0 %v662
    %v664 = vand.u32 %v43, 4294901760
    %v665 = vsub.f32 %v43, %v664
    %666 = vmatpush1.msra.mxu0 %v665
    %v667 = vand.u32 %v46, 4294901760
    %v668 = vsub.f32 %v46, %v667
    %669 = vmatprep.subr.mxu0 %v668
    %v670 = vand.u32 %v45, 4294901760
    %v671 = vsub.f32 %v45, %v670
    %672 = vmatpush1.msra.mxu0 %v671
    %v673 = vand.u32 %v48, 4294901760
    %v674 = vsub.f32 %v48, %v673
    %675 = vmatprep.subr.mxu0 %v674
    %v676 = vand.u32 %v47, 4294901760
    %v677 = vsub.f32 %v47, %v676
    %678 = vmatpush1.msra.mxu0 %v677
    %v679 = vand.u32 %v50, 4294901760
    %v680 = vsub.f32 %v50, %v679
    %681 = vmatprep.subr.mxu0 %v680
    %v682 = vand.u32 %v49, 4294901760
    %v683 = vsub.f32 %v49, %v682
    %684 = vmatpush1.msra.mxu0 %v683
    %v685 = vand.u32 %v52, 4294901760
    %v686 = vsub.f32 %v52, %v685
    %687 = vmatprep.subr.mxu0 %v686
    %v688 = vand.u32 %v51, 4294901760
    %v689 = vsub.f32 %v51, %v688
    %690 = vmatpush1.msra.mxu0 %v689
    %v691 = vand.u32 %v54, 4294901760
    %v692 = vsub.f32 %v54, %v691
    %693 = vmatprep.subr.mxu0 %v692
    %v694 = vand.u32 %v53, 4294901760
    %v695 = vsub.f32 %v53, %v694
    %696 = vmatpush1.msra.mxu0 %v695
    %v697 = vand.u32 %v56, 4294901760
    %v698 = vsub.f32 %v56, %v697
    %699 = vmatprep.subr.mxu0 %v698
    %v700 = vand.u32 %v55, 4294901760
    %v701 = vsub.f32 %v55, %v700
    %702 = vmatpush1.msra.mxu0 %v701
    %v703 = vand.u32 %v58, 4294901760
    %v704 = vsub.f32 %v58, %v703
    %705 = vmatprep.subr.mxu0 %v704
    %v706 = vand.u32 %v57, 4294901760
    %v707 = vsub.f32 %v57, %v706
    %708 = vmatpush1.msra.mxu0 %v707
    %v709 = vand.u32 %v60, 4294901760
    %v710 = vsub.f32 %v60, %v709
    %711 = vmatprep.subr.mxu0 %v710
    %v712 = vand.u32 %v59, 4294901760
    %v713 = vsub.f32 %v59, %v712
    %714 = vmatpush1.msra.mxu0 %v713
    %v715 = vand.u32 %v62, 4294901760
    %v716 = vsub.f32 %v62, %v715
    %717 = vmatprep.subr.mxu0 %v716
    %v718 = vand.u32 %v61, 4294901760
    %v719 = vsub.f32 %v61, %v718
    %720 = vmatpush1.msra.mxu0 %v719
    %v721 = vand.u32 %v64, 4294901760
    %v722 = vsub.f32 %v64, %v721
    %723 = vmatprep.subr.mxu0 %v722
    %v724 = vand.u32 %v63, 4294901760
    %v725 = vsub.f32 %v63, %v724
    %726 = vmatpush1.msra.mxu0 %v725
    %v727 = vand.u32 %v66, 4294901760
    %v728 = vsub.f32 %v66, %v727
    %729 = vmatprep.subr.mxu0 %v728
    %v730 = vand.u32 %v65, 4294901760
    %v731 = vsub.f32 %v65, %v730
    %732 = vmatpush1.msra.mxu0 %v731
    %v733 = vand.u32 %v68, 4294901760
    %v734 = vsub.f32 %v68, %v733
    %735 = vmatprep.subr.mxu0 %v734
    %v736 = vand.u32 %v67, 4294901760
    %v737 = vsub.f32 %v67, %v736
    %738 = vmatpush1.msra.mxu0 %v737
    %v739 = vand.u32 %v70, 4294901760
    %v740 = vsub.f32 %v70, %v739
    %741 = vmatprep.subr.mxu0 %v740
    %v742 = vand.u32 %v69, 4294901760
    %v743 = vsub.f32 %v69, %v742
    %744 = vmatpush1.msra.mxu0 %v743
    %v745 = vand.u32 %v72, 4294901760
    %v746 = vsub.f32 %v72, %v745
    %747 = vmatprep.subr.mxu0 %v746
    %v748 = vand.u32 %v71, 4294901760
    %v749 = vsub.f32 %v71, %v748
    %750 = vmatpush1.msra.mxu0 %v749
    %v751 = vand.u32 %v74, 4294901760
    %v752 = vsub.f32 %v74, %v751
    %753 = vmatprep.subr.mxu0 %v752
    %v754 = vand.u32 %v73, 4294901760
    %v755 = vsub.f32 %v73, %v754
    %756 = vmatpush1.msra.mxu0 %v755
    %v757 = vand.u32 %v76, 4294901760
    %v758 = vsub.f32 %v76, %v757
    %759 = vmatprep.subr.mxu0 %v758
    %v760 = vand.u32 %v75, 4294901760
    %v761 = vsub.f32 %v75, %v760
    %762 = vmatpush1.msra.mxu0 %v761
    %v763 = vand.u32 %v78, 4294901760
    %v764 = vsub.f32 %v78, %v763
    %765 = vmatprep.subr.mxu0 %v764
    %v766 = vand.u32 %v77, 4294901760
    %v767 = vsub.f32 %v77, %v766
    %768 = vmatpush1.msra.mxu0 %v767
    %v769 = vand.u32 %v80, 4294901760
    %v770 = vsub.f32 %v80, %v769
    %771 = vmatprep.subr.mxu0 %v770
    %v772 = vand.u32 %v79, 4294901760
    %v773 = vsub.f32 %v79, %v772
    %774 = vmatpush1.msra.mxu0 %v773
    %v775 = vand.u32 %v82, 4294901760
    %v776 = vsub.f32 %v82, %v775
    %777 = vmatprep.subr.mxu0 %v776
    %v778 = vand.u32 %v81, 4294901760
    %v779 = vsub.f32 %v81, %v778
    %780 = vmatpush1.msra.mxu0 %v779
    %v781 = vand.u32 %v84, 4294901760
    %v782 = vsub.f32 %v84, %v781
    %783 = vmatprep.subr.mxu0 %v782
    %v784 = vand.u32 %v83, 4294901760
    %v785 = vsub.f32 %v83, %v784
    %786 = vmatpush1.msra.mxu0 %v785
    %v787 = vand.u32 %v86, 4294901760
    %v788 = vsub.f32 %v86, %v787
    %789 = vmatprep.subr.mxu0 %v788
    %v790 = vand.u32 %v85, 4294901760
    %v791 = vsub.f32 %v85, %v790
    %792 = vmatpush1.msra.mxu0 %v791
    %v793 = vand.u32 %v88, 4294901760
    %v794 = vsub.f32 %v88, %v793
    %795 = vmatprep.subr.mxu0 %v794
    %v796 = vand.u32 %v87, 4294901760
    %v797 = vsub.f32 %v87, %v796
    %798 = vmatpush1.msra.mxu0 %v797
    %v799 = vand.u32 %v90, 4294901760
    %v800 = vsub.f32 %v90, %v799
    %801 = vmatprep.subr.mxu0 %v800
    %v802 = vand.u32 %v89, 4294901760
    %v803 = vsub.f32 %v89, %v802
    %804 = vmatpush1.msra.mxu0 %v803
    %v805 = vand.u32 %v92, 4294901760
    %v806 = vsub.f32 %v92, %v805
    %807 = vmatprep.subr.mxu0 %v806
    %v808 = vand.u32 %v91, 4294901760
    %v809 = vsub.f32 %v91, %v808
    %810 = vmatpush1.msra.mxu0 %v809
    %v811 = vand.u32 %v94, 4294901760
    %v812 = vsub.f32 %v94, %v811
    %813 = vmatprep.subr.mxu0 %v812
    %v814 = vand.u32 %v93, 4294901760
    %v815 = vsub.f32 %v93, %v814
    %816 = vmatpush1.msra.mxu0 %v815
    %v817 = vand.u32 %v96, 4294901760
    %v818 = vsub.f32 %v96, %v817
    %819 = vmatprep.subr.mxu0 %v818
    %v820 = vand.u32 %v95, 4294901760
    %v821 = vsub.f32 %v95, %v820
    %822 = vmatpush1.msra.mxu0 %v821
    %v823 = vand.u32 %v98, 4294901760
    %v824 = vsub.f32 %v98, %v823
    %825 = vmatprep.subr.mxu0 %v824
    %v826 = vand.u32 %v97, 4294901760
    %v827 = vsub.f32 %v97, %v826
    %828 = vmatpush1.msra.mxu0 %v827
    %v829 = vand.u32 %v34, 4294901760
    %v830 = vsub.f32 %v34, %v829
    %831 = vmatprep.mubr.f32.mxu0 %v830
    %v832 = vand.u32 %v33, 4294901760
    %v833 = vsub.f32 %v33, %v832
    %834 = vmatmul.mubr.f32.gmra.mrb[0].mxu0 %v833
    %v835 = vpop.f32.mrb[0].mxu0
    %v836 = vadd.f32 %v633, %v835
    %v837 = vpop.f32.mrb[0].mxu0
    %v838 = vadd.f32 %v635, %v837
    %839 = vdwg.mxu0
    %v840 = vand.u32 %v36, 4294901760
    %841 = vmatprep.subr.mxu0 %v840
    %v842 = vand.u32 %v35, 4294901760
    %843 = vmatpush1.msra.mxu0 %v842
    %v844 = vand.u32 %v38, 4294901760
    %845 = vmatprep.subr.mxu0 %v844
    %v846 = vand.u32 %v37, 4294901760
    %847 = vmatpush1.msra.mxu0 %v846
    %v848 = vand.u32 %v40, 4294901760
    %849 = vmatprep.subr.mxu0 %v848
    %v850 = vand.u32 %v39, 4294901760
    %851 = vmatpush1.msra.mxu0 %v850
    %v852 = vand.u32 %v42, 4294901760
    %853 = vmatprep.subr.mxu0 %v852
    %v854 = vand.u32 %v41, 4294901760
    %855 = vmatpush1.msra.mxu0 %v854
    %v856 = vand.u32 %v44, 4294901760
    %857 = vmatprep.subr.mxu0 %v856
    %v858 = vand.u32 %v43, 4294901760
    %859 = vmatpush1.msra.mxu0 %v858
    %v860 = vand.u32 %v46, 4294901760
    %861 = vmatprep.subr.mxu0 %v860
    %v862 = vand.u32 %v45, 4294901760
    %863 = vmatpush1.msra.mxu0 %v862
    %v864 = vand.u32 %v48, 4294901760
    %865 = vmatprep.subr.mxu0 %v864
    %v866 = vand.u32 %v47, 4294901760
    %867 = vmatpush1.msra.mxu0 %v866
    %v868 = vand.u32 %v50, 4294901760
    %869 = vmatprep.subr.mxu0 %v868
    %v870 = vand.u32 %v49, 4294901760
    %871 = vmatpush1.msra.mxu0 %v870
    %v872 = vand.u32 %v52, 4294901760
    %873 = vmatprep.subr.mxu0 %v872
    %v874 = vand.u32 %v51, 4294901760
    %875 = vmatpush1.msra.mxu0 %v874
    %v876 = vand.u32 %v54, 4294901760
    %877 = vmatprep.subr.mxu0 %v876
    %v878 = vand.u32 %v53, 4294901760
    %879 = vmatpush1.msra.mxu0 %v878
    %v880 = vand.u32 %v56, 4294901760
    %881 = vmatprep.subr.mxu0 %v880
    %v882 = vand.u32 %v55, 4294901760
    %883 = vmatpush1.msra.mxu0 %v882
    %v884 = vand.u32 %v58, 4294901760
    %885 = vmatprep.subr.mxu0 %v884
    %v886 = vand.u32 %v57, 4294901760
    %887 = vmatpush1.msra.mxu0 %v886
    %v888 = vand.u32 %v60, 4294901760
    %889 = vmatprep.subr.mxu0 %v888
    %v890 = vand.u32 %v59, 4294901760
    %891 = vmatpush1.msra.mxu0 %v890
    %v892 = vand.u32 %v62, 4294901760
    %893 = vmatprep.subr.mxu0 %v892
    %v894 = vand.u32 %v61, 4294901760
    %895 = vmatpush1.msra.mxu0 %v894
    %v896 = vand.u32 %v64, 4294901760
    %897 = vmatprep.subr.mxu0 %v896
    %v898 = vand.u32 %v63, 4294901760
    %899 = vmatpush1.msra.mxu0 %v898
    %v900 = vand.u32 %v66, 4294901760
    %901 = vmatprep.subr.mxu0 %v900
    %v902 = vand.u32 %v65, 4294901760
    %903 = vmatpush1.msra.mxu0 %v902
    %v904 = vand.u32 %v68, 4294901760
    %905 = vmatprep.subr.mxu0 %v904
    %v906 = vand.u32 %v67, 4294901760
    %907 = vmatpush1.msra.mxu0 %v906
    %v908 = vand.u32 %v70, 4294901760
    %909 = vmatprep.subr.mxu0 %v908
    %v910 = vand.u32 %v69, 4294901760
    %911 = vmatpush1.msra.mxu0 %v910
    %v912 = vand.u32 %v72, 4294901760
    %913 = vmatprep.subr.mxu0 %v912
    %v914 = vand.u32 %v71, 4294901760
    %915 = vmatpush1.msra.mxu0 %v914
    %v916 = vand.u32 %v74, 4294901760
    %917 = vmatprep.subr.mxu0 %v916
    %v918 = vand.u32 %v73, 4294901760
    %919 = vmatpush1.msra.mxu0 %v918
    %v920 = vand.u32 %v76, 4294901760
    %921 = vmatprep.subr.mxu0 %v920
    %v922 = vand.u32 %v75, 4294901760
    %923 = vmatpush1.msra.mxu0 %v922
    %v924 = vand.u32 %v78, 4294901760
    %925 = vmatprep.subr.mxu0 %v924
    %v926 = vand.u32 %v77, 4294901760
    %927 = vmatpush1.msra.mxu0 %v926
    %v928 = vand.u32 %v80, 4294901760
    %929 = vmatprep.subr.mxu0 %v928
    %v930 = vand.u32 %v79, 4294901760
    %931 = vmatpush1.msra.mxu0 %v930
    %v932 = vand.u32 %v82, 4294901760
    %933 = vmatprep.subr.mxu0 %v932
    %v934 = vand.u32 %v81, 4294901760
    %935 = vmatpush1.msra.mxu0 %v934
    %v936 = vand.u32 %v84, 4294901760
    %937 = vmatprep.subr.mxu0 %v936
    %v938 = vand.u32 %v83, 4294901760
    %939 = vmatpush1.msra.mxu0 %v938
    %v940 = vand.u32 %v86, 4294901760
    %941 = vmatprep.subr.mxu0 %v940
    %v942 = vand.u32 %v85, 4294901760
    %943 = vmatpush1.msra.mxu0 %v942
    %v944 = vand.u32 %v88, 4294901760
    %945 = vmatprep.subr.mxu0 %v944
    %v946 = vand.u32 %v87, 4294901760
    %947 = vmatpush1.msra.mxu0 %v946
    %v948 = vand.u32 %v90, 4294901760
    %949 = vmatprep.subr.mxu0 %v948
    %v950 = vand.u32 %v89, 4294901760
    %951 = vmatpush1.msra.mxu0 %v950
    %v952 = vand.u32 %v92, 4294901760
    %953 = vmatprep.subr.mxu0 %v952
    %v954 = vand.u32 %v91, 4294901760
    %955 = vmatpush1.msra.mxu0 %v954
    %v956 = vand.u32 %v94, 4294901760
    %957 = vmatprep.subr.mxu0 %v956
    %v958 = vand.u32 %v93, 4294901760
    %959 = vmatpush1.msra.mxu0 %v958
    %v960 = vand.u32 %v96, 4294901760
    %961 = vmatprep.subr.mxu0 %v960
    %v962 = vand.u32 %v95, 4294901760
    %963 = vmatpush1.msra.mxu0 %v962
    %v964 = vand.u32 %v98, 4294901760
    %965 = vmatprep.subr.mxu0 %v964
    %v966 = vand.u32 %v97, 4294901760
    %967 = vmatpush1.msra.mxu0 %v966
    %v968 = vand.u32 %v34, 4294901760
    %v969 = vsub.f32 %v34, %v968
    %v970 = vand.u32 %v969, 4294901760
    %971 = vmatprep.mubr.f32.mxu0 %v970
    %v972 = vand.u32 %v33, 4294901760
    %v973 = vsub.f32 %v33, %v972
    %v974 = vand.u32 %v973, 4294901760
    %975 = vmatmul.mubr.f32.gmra.mrb[0].mxu0 %v974
    %v976 = vpop.f32.mrb[0].mxu0
    %v977 = vadd.f32 %v836, %v976
    %v978 = vpop.f32.mrb[0].mxu0
    %v979 = vadd.f32 %v838, %v978
    %980 = vdwg.mxu0
    %v981 = vand.u32 %v36, 4294901760
    %v982 = vsub.f32 %v36, %v981
    %v983 = vand.u32 %v982, 4294901760
    %984 = vmatprep.subr.mxu0 %v983
    %v985 = vand.u32 %v35, 4294901760
    %v986 = vsub.f32 %v35, %v985
    %v987 = vand.u32 %v986, 4294901760
    %988 = vmatpush1.msra.mxu0 %v987
    %v989 = vand.u32 %v38, 4294901760
    %v990 = vsub.f32 %v38, %v989
    %v991 = vand.u32 %v990, 4294901760
    %992 = vmatprep.subr.mxu0 %v991
    %v993 = vand.u32 %v37, 4294901760
    %v994 = vsub.f32 %v37, %v993
    %v995 = vand.u32 %v994, 4294901760
    %996 = vmatpush1.msra.mxu0 %v995
    %v997 = vand.u32 %v40, 4294901760
    %v998 = vsub.f32 %v40, %v997
    %v999 = vand.u32 %v998, 4294901760
    %1000 = vmatprep.subr.mxu0 %v999
    %v1001 = vand.u32 %v39, 4294901760
    %v1002 = vsub.f32 %v39, %v1001
    %v1003 = vand.u32 %v1002, 4294901760
    %1004 = vmatpush1.msra.mxu0 %v1003
    %v1005 = vand.u32 %v42, 4294901760
    %v1006 = vsub.f32 %v42, %v1005
    %v1007 = vand.u32 %v1006, 4294901760
    %1008 = vmatprep.subr.mxu0 %v1007
    %v1009 = vand.u32 %v41, 4294901760
    %v1010 = vsub.f32 %v41, %v1009
    %v1011 = vand.u32 %v1010, 4294901760
    %1012 = vmatpush1.msra.mxu0 %v1011
    %v1013 = vand.u32 %v44, 4294901760
    %v1014 = vsub.f32 %v44, %v1013
    %v1015 = vand.u32 %v1014, 4294901760
    %1016 = vmatprep.subr.mxu0 %v1015
    %v1017 = vand.u32 %v43, 4294901760
    %v1018 = vsub.f32 %v43, %v1017
    %v1019 = vand.u32 %v1018, 4294901760
    %1020 = vmatpush1.msra.mxu0 %v1019
    %v1021 = vand.u32 %v46, 4294901760
    %v1022 = vsub.f32 %v46, %v1021
    %v1023 = vand.u32 %v1022, 4294901760
    %1024 = vmatprep.subr.mxu0 %v1023
    %v1025 = vand.u32 %v45, 4294901760
    %v1026 = vsub.f32 %v45, %v1025
    %v1027 = vand.u32 %v1026, 4294901760
    %1028 = vmatpush1.msra.mxu0 %v1027
    %v1029 = vand.u32 %v48, 4294901760
    %v1030 = vsub.f32 %v48, %v1029
    %v1031 = vand.u32 %v1030, 4294901760
    %1032 = vmatprep.subr.mxu0 %v1031
    %v1033 = vand.u32 %v47, 4294901760
    %v1034 = vsub.f32 %v47, %v1033
    %v1035 = vand.u32 %v1034, 4294901760
    %1036 = vmatpush1.msra.mxu0 %v1035
    %v1037 = vand.u32 %v50, 4294901760
    %v1038 = vsub.f32 %v50, %v1037
    %v1039 = vand.u32 %v1038, 4294901760
    %1040 = vmatprep.subr.mxu0 %v1039
    %v1041 = vand.u32 %v49, 4294901760
    %v1042 = vsub.f32 %v49, %v1041
    %v1043 = vand.u32 %v1042, 4294901760
    %1044 = vmatpush1.msra.mxu0 %v1043
    %v1045 = vand.u32 %v52, 4294901760
    %v1046 = vsub.f32 %v52, %v1045
    %v1047 = vand.u32 %v1046, 4294901760
    %1048 = vmatprep.subr.mxu0 %v1047
    %v1049 = vand.u32 %v51, 4294901760
    %v1050 = vsub.f32 %v51, %v1049
    %v1051 = vand.u32 %v1050, 4294901760
    %1052 = vmatpush1.msra.mxu0 %v1051
    %v1053 = vand.u32 %v54, 4294901760
    %v1054 = vsub.f32 %v54, %v1053
    %v1055 = vand.u32 %v1054, 4294901760
    %1056 = vmatprep.subr.mxu0 %v1055
    %v1057 = vand.u32 %v53, 4294901760
    %v1058 = vsub.f32 %v53, %v1057
    %v1059 = vand.u32 %v1058, 4294901760
    %1060 = vmatpush1.msra.mxu0 %v1059
    %v1061 = vand.u32 %v56, 4294901760
    %v1062 = vsub.f32 %v56, %v1061
    %v1063 = vand.u32 %v1062, 4294901760
    %1064 = vmatprep.subr.mxu0 %v1063
    %v1065 = vand.u32 %v55, 4294901760
    %v1066 = vsub.f32 %v55, %v1065
    %v1067 = vand.u32 %v1066, 4294901760
    %1068 = vmatpush1.msra.mxu0 %v1067
    %v1069 = vand.u32 %v58, 4294901760
    %v1070 = vsub.f32 %v58, %v1069
    %v1071 = vand.u32 %v1070, 4294901760
    %1072 = vmatprep.subr.mxu0 %v1071
    %v1073 = vand.u32 %v57, 4294901760
    %v1074 = vsub.f32 %v57, %v1073
    %v1075 = vand.u32 %v1074, 4294901760
    %1076 = vmatpush1.msra.mxu0 %v1075
    %v1077 = vand.u32 %v60, 4294901760
    %v1078 = vsub.f32 %v60, %v1077
    %v1079 = vand.u32 %v1078, 4294901760
    %1080 = vmatprep.subr.mxu0 %v1079
    %v1081 = vand.u32 %v59, 4294901760
    %v1082 = vsub.f32 %v59, %v1081
    %v1083 = vand.u32 %v1082, 4294901760
    %1084 = vmatpush1.msra.mxu0 %v1083
    %v1085 = vand.u32 %v62, 4294901760
    %v1086 = vsub.f32 %v62, %v1085
    %v1087 = vand.u32 %v1086, 4294901760
    %1088 = vmatprep.subr.mxu0 %v1087
    %v1089 = vand.u32 %v61, 4294901760
    %v1090 = vsub.f32 %v61, %v1089
    %v1091 = vand.u32 %v1090, 4294901760
    %1092 = vmatpush1.msra.mxu0 %v1091
    %v1093 = vand.u32 %v64, 4294901760
    %v1094 = vsub.f32 %v64, %v1093
    %v1095 = vand.u32 %v1094, 4294901760
    %1096 = vmatprep.subr.mxu0 %v1095
    %v1097 = vand.u32 %v63, 4294901760
    %v1098 = vsub.f32 %v63, %v1097
    %v1099 = vand.u32 %v1098, 4294901760
    %1100 = vmatpush1.msra.mxu0 %v1099
    %v1101 = vand.u32 %v66, 4294901760
    %v1102 = vsub.f32 %v66, %v1101
    %v1103 = vand.u32 %v1102, 4294901760
    %1104 = vmatprep.subr.mxu0 %v1103
    %v1105 = vand.u32 %v65, 4294901760
    %v1106 = vsub.f32 %v65, %v1105
    %v1107 = vand.u32 %v1106, 4294901760
    %1108 = vmatpush1.msra.mxu0 %v1107
    %v1109 = vand.u32 %v68, 4294901760
    %v1110 = vsub.f32 %v68, %v1109
    %v1111 = vand.u32 %v1110, 4294901760
    %1112 = vmatprep.subr.mxu0 %v1111
    %v1113 = vand.u32 %v67, 4294901760
    %v1114 = vsub.f32 %v67, %v1113
    %v1115 = vand.u32 %v1114, 4294901760
    %1116 = vmatpush1.msra.mxu0 %v1115
    %v1117 = vand.u32 %v70, 4294901760
    %v1118 = vsub.f32 %v70, %v1117
    %v1119 = vand.u32 %v1118, 4294901760
    %1120 = vmatprep.subr.mxu0 %v1119
    %v1121 = vand.u32 %v69, 4294901760
    %v1122 = vsub.f32 %v69, %v1121
    %v1123 = vand.u32 %v1122, 4294901760
    %1124 = vmatpush1.msra.mxu0 %v1123
    %v1125 = vand.u32 %v72, 4294901760
    %v1126 = vsub.f32 %v72, %v1125
    %v1127 = vand.u32 %v1126, 4294901760
    %1128 = vmatprep.subr.mxu0 %v1127
    %v1129 = vand.u32 %v71, 4294901760
    %v1130 = vsub.f32 %v71, %v1129
    %v1131 = vand.u32 %v1130, 4294901760
    %1132 = vmatpush1.msra.mxu0 %v1131
    %v1133 = vand.u32 %v74, 4294901760
    %v1134 = vsub.f32 %v74, %v1133
    %v1135 = vand.u32 %v1134, 4294901760
    %1136 = vmatprep.subr.mxu0 %v1135
    %v1137 = vand.u32 %v73, 4294901760
    %v1138 = vsub.f32 %v73, %v1137
    %v1139 = vand.u32 %v1138, 4294901760
    %1140 = vmatpush1.msra.mxu0 %v1139
    %v1141 = vand.u32 %v76, 4294901760
    %v1142 = vsub.f32 %v76, %v1141
    %v1143 = vand.u32 %v1142, 4294901760
    %1144 = vmatprep.subr.mxu0 %v1143
    %v1145 = vand.u32 %v75, 4294901760
    %v1146 = vsub.f32 %v75, %v1145
    %v1147 = vand.u32 %v1146, 4294901760
    %1148 = vmatpush1.msra.mxu0 %v1147
    %v1149 = vand.u32 %v78, 4294901760
    %v1150 = vsub.f32 %v78, %v1149
    %v1151 = vand.u32 %v1150, 4294901760
    %1152 = vmatprep.subr.mxu0 %v1151
    %v1153 = vand.u32 %v77, 4294901760
    %v1154 = vsub.f32 %v77, %v1153
    %v1155 = vand.u32 %v1154, 4294901760
    %1156 = vmatpush1.msra.mxu0 %v1155
    %v1157 = vand.u32 %v80, 4294901760
    %v1158 = vsub.f32 %v80, %v1157
    %v1159 = vand.u32 %v1158, 4294901760
    %1160 = vmatprep.subr.mxu0 %v1159
    %v1161 = vand.u32 %v79, 4294901760
    %v1162 = vsub.f32 %v79, %v1161
    %v1163 = vand.u32 %v1162, 4294901760
    %1164 = vmatpush1.msra.mxu0 %v1163
    %v1165 = vand.u32 %v82, 4294901760
    %v1166 = vsub.f32 %v82, %v1165
    %v1167 = vand.u32 %v1166, 4294901760
    %1168 = vmatprep.subr.mxu0 %v1167
    %v1169 = vand.u32 %v81, 4294901760
    %v1170 = vsub.f32 %v81, %v1169
    %v1171 = vand.u32 %v1170, 4294901760
    %1172 = vmatpush1.msra.mxu0 %v1171
    %v1173 = vand.u32 %v84, 4294901760
    %v1174 = vsub.f32 %v84, %v1173
    %v1175 = vand.u32 %v1174, 4294901760
    %1176 = vmatprep.subr.mxu0 %v1175
    %v1177 = vand.u32 %v83, 4294901760
    %v1178 = vsub.f32 %v83, %v1177
    %v1179 = vand.u32 %v1178, 4294901760
    %1180 = vmatpush1.msra.mxu0 %v1179
    %v1181 = vand.u32 %v86, 4294901760
    %v1182 = vsub.f32 %v86, %v1181
    %v1183 = vand.u32 %v1182, 4294901760
    %1184 = vmatprep.subr.mxu0 %v1183
    %v1185 = vand.u32 %v85, 4294901760
    %v1186 = vsub.f32 %v85, %v1185
    %v1187 = vand.u32 %v1186, 4294901760
    %1188 = vmatpush1.msra.mxu0 %v1187
    %v1189 = vand.u32 %v88, 4294901760
    %v1190 = vsub.f32 %v88, %v1189
    %v1191 = vand.u32 %v1190, 4294901760
    %1192 = vmatprep.subr.mxu0 %v1191
    %v1193 = vand.u32 %v87, 4294901760
    %v1194 = vsub.f32 %v87, %v1193
    %v1195 = vand.u32 %v1194, 4294901760
    %1196 = vmatpush1.msra.mxu0 %v1195
    %v1197 = vand.u32 %v90, 4294901760
    %v1198 = vsub.f32 %v90, %v1197
    %v1199 = vand.u32 %v1198, 4294901760
    %1200 = vmatprep.subr.mxu0 %v1199
    %v1201 = vand.u32 %v89, 4294901760
    %v1202 = vsub.f32 %v89, %v1201
    %v1203 = vand.u32 %v1202, 4294901760
    %1204 = vmatpush1.msra.mxu0 %v1203
    %v1205 = vand.u32 %v92, 4294901760
    %v1206 = vsub.f32 %v92, %v1205
    %v1207 = vand.u32 %v1206, 4294901760
    %1208 = vmatprep.subr.mxu0 %v1207
    %v1209 = vand.u32 %v91, 4294901760
    %v1210 = vsub.f32 %v91, %v1209
    %v1211 = vand.u32 %v1210, 4294901760
    %1212 = vmatpush1.msra.mxu0 %v1211
    %v1213 = vand.u32 %v94, 4294901760
    %v1214 = vsub.f32 %v94, %v1213
    %v1215 = vand.u32 %v1214, 4294901760
    %1216 = vmatprep.subr.mxu0 %v1215
    %v1217 = vand.u32 %v93, 4294901760
    %v1218 = vsub.f32 %v93, %v1217
    %v1219 = vand.u32 %v1218, 4294901760
    %1220 = vmatpush1.msra.mxu0 %v1219
    %v1221 = vand.u32 %v96, 4294901760
    %v1222 = vsub.f32 %v96, %v1221
    %v1223 = vand.u32 %v1222, 4294901760
    %1224 = vmatprep.subr.mxu0 %v1223
    %v1225 = vand.u32 %v95, 4294901760
    %v1226 = vsub.f32 %v95, %v1225
    %v1227 = vand.u32 %v1226, 4294901760
    %1228 = vmatpush1.msra.mxu0 %v1227
    %v1229 = vand.u32 %v98, 4294901760
    %v1230 = vsub.f32 %v98, %v1229
    %v1231 = vand.u32 %v1230, 4294901760
    %1232 = vmatprep.subr.mxu0 %v1231
    %v1233 = vand.u32 %v97, 4294901760
    %v1234 = vsub.f32 %v97, %v1233
    %v1235 = vand.u32 %v1234, 4294901760
    %1236 = vmatpush1.msra.mxu0 %v1235
    %v1237 = vand.u32 %v34, 4294901760
    %1238 = vmatprep.mubr.f32.mxu0 %v1237
    %v1239 = vand.u32 %v33, 4294901760
    %1240 = vmatmul.mubr.f32.gmra.mrb[0].mxu0 %v1239
    %v1241 = vpop.f32.mrb[0].mxu0
    %v1242 = vadd.f32 %v977, %v1241
    %v1243 = vpop.f32.mrb[0].mxu0
    %v1244 = vadd.f32 %v979, %v1243
    %1245 = vdwg.mxu0
    %v1246 = vand.u32 %v36, 4294901760
    %1247 = vmatprep.subr.mxu0 %v1246
    %v1248 = vand.u32 %v35, 4294901760
    %1249 = vmatpush1.msra.mxu0 %v1248
    %v1250 = vand.u32 %v38, 4294901760
    %1251 = vmatprep.subr.mxu0 %v1250
    %v1252 = vand.u32 %v37, 4294901760
    %1253 = vmatpush1.msra.mxu0 %v1252
    %v1254 = vand.u32 %v40, 4294901760
    %1255 = vmatprep.subr.mxu0 %v1254
    %v1256 = vand.u32 %v39, 4294901760
    %1257 = vmatpush1.msra.mxu0 %v1256
    %v1258 = vand.u32 %v42, 4294901760
    %1259 = vmatprep.subr.mxu0 %v1258
    %v1260 = vand.u32 %v41, 4294901760
    %1261 = vmatpush1.msra.mxu0 %v1260
    %v1262 = vand.u32 %v44, 4294901760
    %1263 = vmatprep.subr.mxu0 %v1262
    %v1264 = vand.u32 %v43, 4294901760
    %1265 = vmatpush1.msra.mxu0 %v1264
    %v1266 = vand.u32 %v46, 4294901760
    %1267 = vmatprep.subr.mxu0 %v1266
    %v1268 = vand.u32 %v45, 4294901760
    %1269 = vmatpush1.msra.mxu0 %v1268
    %v1270 = vand.u32 %v48, 4294901760
    %1271 = vmatprep.subr.mxu0 %v1270
    %v1272 = vand.u32 %v47, 4294901760
    %1273 = vmatpush1.msra.mxu0 %v1272
    %v1274 = vand.u32 %v50, 4294901760
    %1275 = vmatprep.subr.mxu0 %v1274
    %v1276 = vand.u32 %v49, 4294901760
    %1277 = vmatpush1.msra.mxu0 %v1276
    %v1278 = vand.u32 %v52, 4294901760
    %1279 = vmatprep.subr.mxu0 %v1278
    %v1280 = vand.u32 %v51, 4294901760
    %1281 = vmatpush1.msra.mxu0 %v1280
    %v1282 = vand.u32 %v54, 4294901760
    %1283 = vmatprep.subr.mxu0 %v1282
    %v1284 = vand.u32 %v53, 4294901760
    %1285 = vmatpush1.msra.mxu0 %v1284
    %v1286 = vand.u32 %v56, 4294901760
    %1287 = vmatprep.subr.mxu0 %v1286
    %v1288 = vand.u32 %v55, 4294901760
    %1289 = vmatpush1.msra.mxu0 %v1288
    %v1290 = vand.u32 %v58, 4294901760
    %1291 = vmatprep.subr.mxu0 %v1290
    %v1292 = vand.u32 %v57, 4294901760
    %1293 = vmatpush1.msra.mxu0 %v1292
    %v1294 = vand.u32 %v60, 4294901760
    %1295 = vmatprep.subr.mxu0 %v1294
    %v1296 = vand.u32 %v59, 4294901760
    %1297 = vmatpush1.msra.mxu0 %v1296
    %v1298 = vand.u32 %v62, 4294901760
    %1299 = vmatprep.subr.mxu0 %v1298
    %v1300 = vand.u32 %v61, 4294901760
    %1301 = vmatpush1.msra.mxu0 %v1300
    %v1302 = vand.u32 %v64, 4294901760
    %1303 = vmatprep.subr.mxu0 %v1302
    %v1304 = vand.u32 %v63, 4294901760
    %1305 = vmatpush1.msra.mxu0 %v1304
    %v1306 = vand.u32 %v66, 4294901760
    %1307 = vmatprep.subr.mxu0 %v1306
    %v1308 = vand.u32 %v65, 4294901760
    %1309 = vmatpush1.msra.mxu0 %v1308
    %v1310 = vand.u32 %v68, 4294901760
    %1311 = vmatprep.subr.mxu0 %v1310
    %v1312 = vand.u32 %v67, 4294901760
    %1313 = vmatpush1.msra.mxu0 %v1312
    %v1314 = vand.u32 %v70, 4294901760
    %1315 = vmatprep.subr.mxu0 %v1314
    %v1316 = vand.u32 %v69, 4294901760
    %1317 = vmatpush1.msra.mxu0 %v1316
    %v1318 = vand.u32 %v72, 4294901760
    %1319 = vmatprep.subr.mxu0 %v1318
    %v1320 = vand.u32 %v71, 4294901760
    %1321 = vmatpush1.msra.mxu0 %v1320
    %v1322 = vand.u32 %v74, 4294901760
    %1323 = vmatprep.subr.mxu0 %v1322
    %v1324 = vand.u32 %v73, 4294901760
    %1325 = vmatpush1.msra.mxu0 %v1324
    %v1326 = vand.u32 %v76, 4294901760
    %1327 = vmatprep.subr.mxu0 %v1326
    %v1328 = vand.u32 %v75, 4294901760
    %1329 = vmatpush1.msra.mxu0 %v1328
    %v1330 = vand.u32 %v78, 4294901760
    %1331 = vmatprep.subr.mxu0 %v1330
    %v1332 = vand.u32 %v77, 4294901760
    %1333 = vmatpush1.msra.mxu0 %v1332
    %v1334 = vand.u32 %v80, 4294901760
    %1335 = vmatprep.subr.mxu0 %v1334
    %v1336 = vand.u32 %v79, 4294901760
    %1337 = vmatpush1.msra.mxu0 %v1336
    %v1338 = vand.u32 %v82, 4294901760
    %1339 = vmatprep.subr.mxu0 %v1338
    %v1340 = vand.u32 %v81, 4294901760
    %1341 = vmatpush1.msra.mxu0 %v1340
    %v1342 = vand.u32 %v84, 4294901760
    %1343 = vmatprep.subr.mxu0 %v1342
    %v1344 = vand.u32 %v83, 4294901760
    %1345 = vmatpush1.msra.mxu0 %v1344
    %v1346 = vand.u32 %v86, 4294901760
    %1347 = vmatprep.subr.mxu0 %v1346
    %v1348 = vand.u32 %v85, 4294901760
    %1349 = vmatpush1.msra.mxu0 %v1348
    %v1350 = vand.u32 %v88, 4294901760
    %1351 = vmatprep.subr.mxu0 %v1350
    %v1352 = vand.u32 %v87, 4294901760
    %1353 = vmatpush1.msra.mxu0 %v1352
    %v1354 = vand.u32 %v90, 4294901760
    %1355 = vmatprep.subr.mxu0 %v1354
    %v1356 = vand.u32 %v89, 4294901760
    %1357 = vmatpush1.msra.mxu0 %v1356
    %v1358 = vand.u32 %v92, 4294901760
    %1359 = vmatprep.subr.mxu0 %v1358
    %v1360 = vand.u32 %v91, 4294901760
    %1361 = vmatpush1.msra.mxu0 %v1360
    %v1362 = vand.u32 %v94, 4294901760
    %1363 = vmatprep.subr.mxu0 %v1362
    %v1364 = vand.u32 %v93, 4294901760
    %1365 = vmatpush1.msra.mxu0 %v1364
    %v1366 = vand.u32 %v96, 4294901760
    %1367 = vmatprep.subr.mxu0 %v1366
    %v1368 = vand.u32 %v95, 4294901760
    %1369 = vmatpush1.msra.mxu0 %v1368
    %v1370 = vand.u32 %v98, 4294901760
    %1371 = vmatprep.subr.mxu0 %v1370
    %v1372 = vand.u32 %v97, 4294901760
    %1373 = vmatpush1.msra.mxu0 %v1372
    %v1374 = vand.u32 %v34, 4294901760
    %1375 = vmatprep.mubr.f32.mxu0 %v1374
    %v1376 = vand.u32 %v33, 4294901760
    %1377 = vmatmul.mubr.f32.gmra.mrb[0].mxu0 %v1376
    %v1378 = vpop.f32.mrb[0].mxu0
    %v1379 = vadd.f32 %v1242, %v1378
    %v1380 = vpop.f32.mrb[0].mxu0
    %v1381 = vadd.f32 %v1244, %v1380
    %1382 = vdwg.mxu0
    %v1383 = vand.u32 2147483647, %v1379
    %v1384 = vand.u32 2147483647, %v1381
    %v1385 = vadd.f32 %v1383, 1e-13
    %v1386 = vadd.f32 %v1384, 1e-13
    %v1387 = vlog2.pop %v1385
    %v1388 = vmul.f32 %v1387, 0.6931472
    %v1389 = vlog2.pop %v1386
    %v1390 = vmul.f32 %v1389, 0.6931472
    %s1391 = sld [smem:[#allocation2]]
    %v1392 = vstv %s1391
    %v1393 = vmul.f32 %v1388, %v1392
    %v1394 = vmul.f32 %v1390, %v1392
    %s1395 = sld [smem:[#allocation3]]
    %v1396 = vstv %s1395
    %v1397 = vadd.f32 %v1393, %v1396
    %v1398 = vadd.f32 %v1394, %v1396
    %1399 = vst [vmem:[%s4] sm:$0xff] %v1397
    %1400 = vst [vmem:[%s4 + $0x8] sm:$0xff] %v1398
    // Predicated region
    $region22: #{dct_layer.1} parent=1 // pred_check
      _
    $region23: #{dct_layer.1} parent=1 // pred_check_branch
      %1402 = sbr.rel (0) target = $region25
    $region24: #{dct_layer.1} parent=1 // pred_region
      _
    $region25: #{dct_layer.1} parent=1 // pred_fallthru
      _
    // Predicated region
    $region26: #{dct_layer.1} parent=1 // pred_check
      _
    $region27: #{dct_layer.1} parent=1 // pred_check_branch
      %1404 = sbr.rel (0) target = $region29
    $region28: #{dct_layer.1} parent=1 // pred_region
      _
    $region29: #{dct_layer.1} parent=1 // pred_fallthru
      _
    %1405 = vsyncpa [#allocation5], 1

</llo_original>
